<compile_context>
chip_gen: v7x
topology: tpu7x:2x2x1
jax: 0.10.0
libtpu: 0.0.40
codegen_flags: <defaults>
</compile_context>

<pallas_src>
import functools

import jax
import jax.numpy as jnp
from jax.experimental import pallas as pl
from jax.experimental.pallas import tpu as pltpu

HIDDEN = 500        # logical out_features of both linear layers (PyTorch spec)
HIDDEN_PAD = 512    # lane-aligned (multiple of 128) padded hidden width


def _round_up(x, m):
    return (x + m - 1) // m * m


def py_kernel(y_ref, w1_ref, b1_ref, w2_ref, b2_ref, o_ref):
    # First linear: bf16 operands on the MXU, f32 accumulation.
    h = jnp.dot(y_ref[...], w1_ref[...], preferred_element_type=jnp.float32)
    h = h + b1_ref[...]            # (blk, 512) + (1, 512) broadcast, f32 on VPU
    h = jnp.maximum(h, 0.0)        # ReLU in f32 (v5e VPU has no bf16 math)
    # Second linear: cast activation to bf16 only for the matmul operands.
    z = jnp.dot(h.astype(jnp.bfloat16), w2_ref[...],
                preferred_element_type=jnp.float32)
    z = z + b2_ref[...]
    o_ref[...] = jax.nn.sigmoid(z).astype(o_ref.dtype)   # sigmoid -> EUP slot


@functools.partial(jax.jit, static_argnames=("block_b",))
def py_forward(y, w1, b1, w2, b2, *, block_b=256):
    """Forward pass of PY.

    y:  (B, dim_y) float32
    w1: (dim_y, 500), b1: (500,) or (1, 500)
    w2: (500, 500),   b2: (500,) or (1, 500)
    Returns (B, 500) float32.

    block_b: batch tile.  For v7x (2 TensorCores) keep block_b <= B/2 at
    deployment batch sizes so the "parallel" grid axis spans both cores.
    """
    B, dim_y = y.shape
    b1 = b1.reshape(1, -1)
    b2 = b2.reshape(1, -1)

    # Zero-pad the hidden dimension 500 -> 512 (N of w1/b1, K and N of w2, b2).
    pad_n = HIDDEN_PAD - HIDDEN
    w1p = jnp.pad(w1, ((0, 0), (0, pad_n))).astype(jnp.bfloat16)
    b1p = jnp.pad(b1, ((0, 0), (0, pad_n))).astype(jnp.float32)
    w2p = jnp.pad(w2, ((0, pad_n), (0, pad_n))).astype(jnp.bfloat16)
    b2p = jnp.pad(b2, ((0, 0), (0, pad_n))).astype(jnp.float32)
    y_bf = y.astype(jnp.bfloat16)

    # Effective batch tile: multiple of 8 sublanes, no bigger than needed.
    blk = min(block_b, max(8, _round_up(B, 8)))
    blk = _round_up(blk, 8)
    grid = (pl.cdiv(B, blk),)

    flops = 2 * B * (dim_y * HIDDEN_PAD + HIDDEN_PAD * HIDDEN_PAD)
    bytes_accessed = (
        w1p.size * 2 + w2p.size * 2 + (b1p.size + b2p.size) * 4  # weights/biases
        + B * dim_y * 2 + B * HIDDEN_PAD * 4                     # activations in/out
    )

    out_pad = pl.pallas_call(
        py_kernel,
        out_shape=jax.ShapeDtypeStruct((B, HIDDEN_PAD), jnp.float32),
        grid_spec=pl.GridSpec(
            grid=grid,
            in_specs=[
                pl.BlockSpec((blk, dim_y), lambda i: (i, 0)),              # y batch tile
                pl.BlockSpec((dim_y, HIDDEN_PAD), lambda i: (0, 0)),       # w1 (resident)
                pl.BlockSpec((1, HIDDEN_PAD), lambda i: (0, 0)),           # b1
                pl.BlockSpec((HIDDEN_PAD, HIDDEN_PAD), lambda i: (0, 0)),  # w2 (resident)
                pl.BlockSpec((1, HIDDEN_PAD), lambda i: (0, 0)),           # b2
            ],
            out_specs=pl.BlockSpec((blk, HIDDEN_PAD), lambda i: (i, 0)),
        ),
        compiler_params=pltpu.CompilerParams(
            dimension_semantics=("parallel",),   # batch axis: megacore-shardable
        ),
        cost_estimate=pl.CostEstimate(
            flops=flops,
            transcendentals=B * HIDDEN_PAD,      # sigmoid exp per output element
            bytes_accessed=bytes_accessed,
        ),
    )(y_bf, w1p, b1p, w2p, b2p)

    # Padded columns hold sigmoid(0)=0.5; slice back to the logical 500 outputs.
    return out_pad[:, :HIDDEN]


def init_params(key, dim_y):
    """Deterministic init mimicking nn.Linear's uniform(-1/sqrt(fan_in), 1/sqrt(fan_in))."""
    k1, k2, k3, k4 = jax.random.split(key, 4)
    bound1 = 1.0 / jnp.sqrt(dim_y)
    bound2 = 1.0 / jnp.sqrt(HIDDEN)
    w1 = jax.random.uniform(k1, (dim_y, HIDDEN), jnp.float32, -bound1, bound1)
    b1 = jax.random.uniform(k2, (1, HIDDEN), jnp.float32, -bound1, bound1)
    w2 = jax.random.uniform(k3, (HIDDEN, HIDDEN), jnp.float32, -bound2, bound2)
    b2 = jax.random.uniform(k4, (1, HIDDEN), jnp.float32, -bound2, bound2)
    return w1, b1, w2, b2


if __name__ == "__main__":
    dim_y = 32
    batch = 16

    key = jax.random.PRNGKey(0)
    k_in, k_params = jax.random.split(key)
    y = jax.random.normal(k_in, (batch, dim_y), jnp.float32)
    w1, b1, w2, b2 = init_params(k_params, dim_y)

    # Small tile -> 2 grid steps (exercises the pipelined grid / megacore path).
    out_small = jax.block_until_ready(py_forward(y, w1, b1, w2, b2, block_b=8))
    # Production-default tile (clamped to the batch here).
    out_default = jax.block_until_ready(py_forward(y, w1, b1, w2, b2))

    # Reference in plain f32 JAX (bf16 matmul operands -> looser tolerance).
    ref = jax.nn.sigmoid(jnp.maximum(y @ w1 + b1, 0.0) @ w2 + b2)
    assert out_small.shape == (batch, HIDDEN)
    assert out_default.shape == (batch, HIDDEN)
    assert jnp.allclose(out_small, ref, atol=2e-2, rtol=2e-2)
    assert jnp.allclose(out_default, ref, atol=2e-2, rtol=2e-2)

    print("KERNEL_OK")
</pallas_src>

<mosaic_0001>
module attributes {stable_mosaic.version = 11 : i64} {
  func.func @py_kernel(%arg0: i32, %arg1: memref<8x32xbf16, #tpu.memory_space<vmem>>, %arg2: memref<32x512xbf16, #tpu.memory_space<vmem>>, %arg3: memref<1x512xf32, #tpu.memory_space<vmem>>, %arg4: memref<512x512xbf16, #tpu.memory_space<vmem>>, %arg5: memref<1x512xf32, #tpu.memory_space<vmem>>, %arg6: memref<8x512xf32, #tpu.memory_space<vmem>>) attributes {dimension_semantics = [#tpu.dimension_semantics<parallel>], iteration_bounds = array<i64: 2>, scalar_prefetch = 0 : i64, scratch_operands = 0 : i64, tpu.core_type = #tpu.core_type<tc>, window_params = [{transform_indices = @transform_0, window_bounds = array<i64: 8, 32>}, {pipeline_mode = #tpu.pipeline_mode<synchronous>, transform_indices = @transform_1, window_bounds = array<i64: 32, 512>}, {pipeline_mode = #tpu.pipeline_mode<synchronous>, transform_indices = @transform_2, window_bounds = array<i64: 1, 512>}, {pipeline_mode = #tpu.pipeline_mode<synchronous>, transform_indices = @transform_3, window_bounds = array<i64: 512, 512>}, {pipeline_mode = #tpu.pipeline_mode<synchronous>, transform_indices = @transform_4, window_bounds = array<i64: 1, 512>}, {transform_indices = @transform_5, window_bounds = array<i64: 8, 512>}]} {
    %c0 = arith.constant 0 : index
    %c0_0 = arith.constant 0 : index
    %0 = vector.load %arg1[%c0, %c0_0] : memref<8x32xbf16, #tpu.memory_space<vmem>>, vector<8x32xbf16>
    %c0_1 = arith.constant 0 : index
    %c0_2 = arith.constant 0 : index
    %1 = vector.load %arg2[%c0_1, %c0_2] : memref<32x512xbf16, #tpu.memory_space<vmem>>, vector<32x512xbf16>
    %cst = arith.constant dense<0.000000e+00> : vector<8x512xf32>
    %2 = tpu.matmul %0, %1, %cst {dimension_numbers = #tpu.dot_dimension_numbers<[1], [0], [0], [1], [0, 0, 1, 1], [], []>} : vector<8x32xbf16>, vector<32x512xbf16>, vector<8x512xf32> -> vector<8x512xf32>
    %c0_3 = arith.constant 0 : index
    %c0_4 = arith.constant 0 : index
    %3 = vector.load %arg3[%c0_3, %c0_4] : memref<1x512xf32, #tpu.memory_space<vmem>>, vector<1x512xf32>
    %4 = vector.broadcast %3 : vector<1x512xf32> to vector<8x512xf32>
    %5 = arith.addf %2, %4 : vector<8x512xf32>
    %cst_5 = arith.constant 0.000000e+00 : f32
    %6 = vector.broadcast %cst_5 : f32 to vector<8x512xf32>
    %7 = arith.maximumf %5, %6 : vector<8x512xf32>
    %8 = arith.truncf %7 : vector<8x512xf32> to vector<8x512xbf16>
    %c0_6 = arith.constant 0 : index
    %c0_7 = arith.constant 0 : index
    %9 = vector.load %arg4[%c0_6, %c0_7] : memref<512x512xbf16, #tpu.memory_space<vmem>>, vector<512x512xbf16>
    %cst_8 = arith.constant dense<0.000000e+00> : vector<8x512xf32>
    %10 = tpu.matmul %8, %9, %cst_8 {dimension_numbers = #tpu.dot_dimension_numbers<[1], [0], [0], [1], [0, 0, 1, 1], [], []>} : vector<8x512xbf16>, vector<512x512xbf16>, vector<8x512xf32> -> vector<8x512xf32>
    %c0_9 = arith.constant 0 : index
    %c0_10 = arith.constant 0 : index
    %11 = vector.load %arg5[%c0_9, %c0_10] : memref<1x512xf32, #tpu.memory_space<vmem>>, vector<1x512xf32>
    %12 = vector.broadcast %11 : vector<1x512xf32> to vector<8x512xf32>
    %13 = arith.addf %10, %12 : vector<8x512xf32>
    %14 = arith.negf %13 : vector<8x512xf32>
    %15 = math.exp %14 : vector<8x512xf32>
    %cst_11 = arith.constant 1.000000e+00 : f32
    %16 = vector.broadcast %cst_11 : f32 to vector<8x512xf32>
    %17 = arith.addf %16, %15 : vector<8x512xf32>
    %18 = arith.divf %16, %17 : vector<8x512xf32>
    %c0_12 = arith.constant 0 : index
    %c0_13 = arith.constant 0 : index
    %19 = vector.load %arg6[%c0_12, %c0_13] : memref<8x512xf32, #tpu.memory_space<vmem>>, vector<8x512xf32>
    tpu.vector_store %arg6[%c0_12, %c0_13], %18 {strides = array<i32>} : memref<8x512xf32, #tpu.memory_space<vmem>>, vector<8x512xf32>,
    return
  }
  func.func @transform_0(%arg0: i32) -> (i32, i32) {
    %c0_i32 = arith.constant 0 : i32
    %c0_i32_0 = arith.constant 0 : i32
    return %arg0, %c0_i32 : i32, i32
  }
  func.func @transform_1(%arg0: i32) -> (i32, i32) {
    %c0_i32 = arith.constant 0 : i32
    %c0_i32_0 = arith.constant 0 : i32
    %c0_i32_1 = arith.constant 0 : i32
    return %c0_i32, %c0_i32_0 : i32, i32
  }
  func.func @transform_2(%arg0: i32) -> (i32, i32) {
    %c0_i32 = arith.constant 0 : i32
    %c0_i32_0 = arith.constant 0 : i32
    %c0_i32_1 = arith.constant 0 : i32
    return %c0_i32, %c0_i32_0 : i32, i32
  }
  func.func @transform_3(%arg0: i32) -> (i32, i32) {
    %c0_i32 = arith.constant 0 : i32
    %c0_i32_0 = arith.constant 0 : i32
    %c0_i32_1 = arith.constant 0 : i32
    return %c0_i32, %c0_i32_0 : i32, i32
  }
  func.func @transform_4(%arg0: i32) -> (i32, i32) {
    %c0_i32 = arith.constant 0 : i32
    %c0_i32_0 = arith.constant 0 : i32
    %c0_i32_1 = arith.constant 0 : i32
    return %c0_i32, %c0_i32_0 : i32, i32
  }
  func.func @transform_5(%arg0: i32) -> (i32, i32) {
    %c0_i32 = arith.constant 0 : i32
    %c0_i32_0 = arith.constant 0 : i32
    return %arg0, %c0_i32 : i32, i32
  }
}

</mosaic_0001>

<llo_original>
// kernel: py_forward.1
$region0: #{py_forward.1}
  #allocation0 [shape = 'u32[]', space=smem, size = 0x4, offset = 0x4, fixed_abs, tag = 'smem constant byte address 0x4 - core index']
  #allocation1 [shape = 'u32[144,128]{1,0:T(1,128)}', space=vmem, size = 0x12000, scoped, tag = 'internal scratch']
  %s0 = inlined_call_operand.vmem [shape: bf16[16,32], index: 0, kind: input, shape index: {}]
  %s1 = inlined_call_operand.vmem [shape: bf16[32,512], index: 1, kind: input, shape index: {}]
  %s2 = inlined_call_operand.vmem [shape: f32[1,512], index: 2, kind: input, shape index: {}]
  %s3 = inlined_call_operand.vmem [shape: bf16[512,512], index: 3, kind: input, shape index: {}]
  %s4 = inlined_call_operand.vmem [shape: f32[1,512], index: 4, kind: input, shape index: {}]
  %s5 = inlined_call_operand.hbm [shape: f32[16,512], index: 5, kind: output, shape index: {}]
  %s6 = sld [smem:[#allocation0]]
  $region53: #{py_forward.1} parent=0
    _
  %s8 = ssub.s32 1, %s6
  %s9 = scalar_select 0, %s8, %s6
  $region1: #{py_forward.1} parent=0
    #allocation2 [shape = 'u8[32768]{0}', space=vmem, size = 0x8000, scoped, tag = 'output window, operand 0']
    #allocation3 [shape = 's32[2]{0}', space=sflag, size = 0x8, scoped, tag = 'scoped memory for py_forward.1']
    %10 = vsyncpa [#allocation3], 0
    %s11 = scalar_lea.sflag [#allocation3], 1
    %12 = vsyncpa %s11, 0
    loop: start=0, step=1, limit=4
    $region2: #{py_forward.1} parent=1 // loop_pre_header
      _
    $region3: #{py_forward.1} parent=1 // loop_header
      %s14 = sphi 0, %s18
      %p15 = scmp.ge.s32.totalorder %s14, 4
      %s24 = sphi 0, %s26
      %s27 = sphi 0, %s24
      %s28 = sphi 0, %s27
      %s44 = sphi 0, %s28
      %s48 = sphi 0, %s48
      %s50 = sphi 0, %s48
      %s51 = sphi 0, %s50
      %s65 = sphi 0, %s51
      %s69 = sphi 0, %s69
      %s71 = sphi 0, %s69
      %s72 = sphi 0, %s71
      %s86 = sphi 0, %s72
      %s90 = sphi 0, %s90
      %s92 = sphi 0, %s90
      %s93 = sphi 0, %s92
      %s107 = sphi 0, %s93
      %s111 = sphi 0, %s111
      %s113 = sphi 0, %s111
      %s114 = sphi 0, %s113
      %s128 = sphi 0, %s114
      %s134 = sphi 0, %s136
      %s137 = sphi 0, %s134
      %s138 = sphi 0, %s137
      %s154 = sphi 0, %s138
    $region4: #{py_forward.1} parent=1 // loop_header_branch
      %17 = sbr.rel (%p15) target = $region8
    $region5: #{py_forward.1} parent=1 // loop_body
      %s19 = ssub.s32 %s14, 1
      %s20 = ssub.s32 %s14, 2
      %s21 = sadd.s32 %s14, 1
      %s22 = ssub.s32 %s14, %s21
      %p23 = scmp.eq.s32.totalorder %s22, 0
      %s25 = sadd.s32 %s24, 1
      %s26 = scalar_select %p23, %s24, %s25
      %p29 = pneg %p23
      %p30 = scmp.eq.s32.totalorder %s14, 1
      %p31 = por %p29, %p30
      %p32 = scmp.ne.s32.totalorder %s24, %s27
      %p33 = scmp.eq.s32.totalorder %s14, 0
      %p34 = por %p32, %p33
      %p35 = scmp.ne.s32.totalorder %s24, %s27
      %p36 = scmp.eq.s32.totalorder %s19, 1
      %p37 = por %p35, %p36
      %p38 = scmp.ne.s32.totalorder %s27, %s28
      %p39 = scmp.eq.s32.totalorder %s19, 0
      %p40 = por %p38, %p39
      %p41 = scmp.ne.s32.totalorder %s27, %s28
      %p42 = scmp.eq.s32.totalorder %s20, 1
      %p43 = por %p41, %p42
      %p45 = scmp.ne.s32.totalorder %s28, %s44
      %p46 = scmp.eq.s32.totalorder %s20, 0
      %p47 = por %p45, %p46
      %s49 = sadd.s32 %s48, 1
      %p52 = scmp.eq.s32.totalorder %s14, 1
      %p53 = scmp.ne.s32.totalorder %s48, %s50
      %p54 = scmp.eq.s32.totalorder %s14, 0
      %p55 = por %p53, %p54
      %p56 = scmp.ne.s32.totalorder %s48, %s50
      %p57 = scmp.eq.s32.totalorder %s19, 1
      %p58 = por %p56, %p57
      %p59 = scmp.ne.s32.totalorder %s50, %s51
      %p60 = scmp.eq.s32.totalorder %s19, 0
      %p61 = por %p59, %p60
      %p62 = scmp.ne.s32.totalorder %s50, %s51
      %p63 = scmp.eq.s32.totalorder %s20, 1
      %p64 = por %p62, %p63
      %p66 = scmp.ne.s32.totalorder %s51, %s65
      %p67 = scmp.eq.s32.totalorder %s20, 0
      %p68 = por %p66, %p67
      %s70 = sadd.s32 %s69, 1
      %p73 = scmp.eq.s32.totalorder %s14, 1
      %p74 = scmp.ne.s32.totalorder %s69, %s71
      %p75 = scmp.eq.s32.totalorder %s14, 0
      %p76 = por %p74, %p75
      %p77 = scmp.ne.s32.totalorder %s69, %s71
      %p78 = scmp.eq.s32.totalorder %s19, 1
      %p79 = por %p77, %p78
      %p80 = scmp.ne.s32.totalorder %s71, %s72
      %p81 = scmp.eq.s32.totalorder %s19, 0
      %p82 = por %p80, %p81
      %p83 = scmp.ne.s32.totalorder %s71, %s72
      %p84 = scmp.eq.s32.totalorder %s20, 1
      %p85 = por %p83, %p84
      %p87 = scmp.ne.s32.totalorder %s72, %s86
      %p88 = scmp.eq.s32.totalorder %s20, 0
      %p89 = por %p87, %p88
      %s91 = sadd.s32 %s90, 1
      %p94 = scmp.eq.s32.totalorder %s14, 1
      %p95 = scmp.ne.s32.totalorder %s90, %s92
      %p96 = scmp.eq.s32.totalorder %s14, 0
      %p97 = por %p95, %p96
      %p98 = scmp.ne.s32.totalorder %s90, %s92
      %p99 = scmp.eq.s32.totalorder %s19, 1
      %p100 = por %p98, %p99
      %p101 = scmp.ne.s32.totalorder %s92, %s93
      %p102 = scmp.eq.s32.totalorder %s19, 0
      %p103 = por %p101, %p102
      %p104 = scmp.ne.s32.totalorder %s92, %s93
      %p105 = scmp.eq.s32.totalorder %s20, 1
      %p106 = por %p104, %p105
      %p108 = scmp.ne.s32.totalorder %s93, %s107
      %p109 = scmp.eq.s32.totalorder %s20, 0
      %p110 = por %p108, %p109
      %s112 = sadd.s32 %s111, 1
      %p115 = scmp.eq.s32.totalorder %s14, 1
      %p116 = scmp.ne.s32.totalorder %s111, %s113
      %p117 = scmp.eq.s32.totalorder %s14, 0
      %p118 = por %p116, %p117
      %p119 = scmp.ne.s32.totalorder %s111, %s113
      %p120 = scmp.eq.s32.totalorder %s19, 1
      %p121 = por %p119, %p120
      %p122 = scmp.ne.s32.totalorder %s113, %s114
      %p123 = scmp.eq.s32.totalorder %s19, 0
      %p124 = por %p122, %p123
      %p125 = scmp.ne.s32.totalorder %s113, %s114
      %p126 = scmp.eq.s32.totalorder %s20, 1
      %p127 = por %p125, %p126
      %p129 = scmp.ne.s32.totalorder %s114, %s128
      %p130 = scmp.eq.s32.totalorder %s20, 0
      %p131 = por %p129, %p130
      %s132 = ssub.s32 %s14, %s21
      %p133 = scmp.eq.s32.totalorder %s132, 0
      %s135 = sadd.s32 %s134, 1
      %s136 = scalar_select %p133, %s134, %s135
      %p139 = pneg %p133
      %p140 = scmp.eq.s32.totalorder %s14, 1
      %p141 = por %p139, %p140
      %p142 = scmp.ne.s32.totalorder %s134, %s137
      %p143 = scmp.eq.s32.totalorder %s14, 0
      %p144 = por %p142, %p143
      %p145 = scmp.ne.s32.totalorder %s134, %s137
      %p146 = scmp.eq.s32.totalorder %s19, 1
      %p147 = por %p145, %p146
      %p148 = scmp.ne.s32.totalorder %s137, %s138
      %p149 = scmp.eq.s32.totalorder %s19, 0
      %p150 = por %p148, %p149
      %p151 = scmp.ne.s32.totalorder %s137, %s138
      %p152 = scmp.eq.s32.totalorder %s20, 1
      %p153 = por %p151, %p152
      %p155 = scmp.ne.s32.totalorder %s138, %s154
      %p156 = scmp.eq.s32.totalorder %s20, 0
      %p157 = por %p155, %p156
      %p158 = scmp.le.s32.totalorder 1, %s14
      %p159 = scmp.lt.s32.totalorder %s14, 3
      %p160 = pnand %p158, %p159
      %p161 = pneg %p160
      // Predicated region
      $region9: #{py_forward.1} parent=5 // pred_check
        _
      $region10: #{py_forward.1} parent=5 // pred_check_branch
        %163 = sbr.rel (%p160) target = $region12
      $region11: #{py_forward.1} parent=5 // pred_region
        %s164 = ssub.s32 %s14, 1
        // Predicated region
        $region13: #{py_forward.1} parent=11 // pred_check
          %p165 = pneg %p61
        $region14: #{py_forward.1} parent=11 // pred_check_branch
          %167 = sbr.rel (%p165) target = $region16
        $region15: #{py_forward.1} parent=11 // pred_region
          _
        $region16: #{py_forward.1} parent=11 // pred_fallthru
          _
        // Predicated region
        $region17: #{py_forward.1} parent=11 // pred_check
          %p168 = pneg %p82
        $region18: #{py_forward.1} parent=11 // pred_check_branch
          %170 = sbr.rel (%p168) target = $region20
        $region19: #{py_forward.1} parent=11 // pred_region
          _
        $region20: #{py_forward.1} parent=11 // pred_fallthru
          _
        // Predicated region
        $region21: #{py_forward.1} parent=11 // pred_check
          %p171 = pneg %p103
        $region22: #{py_forward.1} parent=11 // pred_check_branch
          %173 = sbr.rel (%p171) target = $region24
        $region23: #{py_forward.1} parent=11 // pred_region
          _
        $region24: #{py_forward.1} parent=11 // pred_fallthru
          _
        // Predicated region
        $region25: #{py_forward.1} parent=11 // pred_check
          %p174 = pneg %p124
        $region26: #{py_forward.1} parent=11 // pred_check_branch
          %176 = sbr.rel (%p174) target = $region28
        $region27: #{py_forward.1} parent=11 // pred_region
          _
        $region28: #{py_forward.1} parent=11 // pred_fallthru
          _
      $region12: #{py_forward.1} parent=5 // pred_fallthru
        _
      %p177 = scmp.lt.s32.totalorder %s14, 2
      // Predicated region
      $region29: #{py_forward.1} parent=5 // pred_check
        %p178 = pneg %p177
      $region30: #{py_forward.1} parent=5 // pred_check_branch
        %180 = sbr.rel (%p178) target = $region32
      $region31: #{py_forward.1} parent=5 // pred_region
        // Predicated region
        $region33: #{py_forward.1} parent=31 // pred_check
          %p181 = pneg %p34
        $region34: #{py_forward.1} parent=31 // pred_check_branch
          %183 = sbr.rel (%p181) target = $region36
        $region35: #{py_forward.1} parent=31 // pred_region
          %p184 = scmp.lt.s32.totalorder %s14, 1
          %s185 = scalar_select %p184, %s14, 1
          %s186 = smul.addr %s185, 4
          %s187 = scalar_lea.vmem %s0, %s186
        $region36: #{py_forward.1} parent=31 // pred_fallthru
          _
      $region32: #{py_forward.1} parent=5 // pred_fallthru
        _
      %p188 = scmp.le.s32.totalorder 1, %s14
      %p189 = scmp.lt.s32.totalorder %s14, 3
      %p190 = pnand %p188, %p189
      %p191 = pneg %p190
      // Predicated region
      $region37: #{py_forward.1} parent=5 // pred_check
        _
      $region38: #{py_forward.1} parent=5 // pred_check_branch
        %193 = sbr.rel (%p190) target = $region40
      $region39: #{py_forward.1} parent=5 // pred_region
        %s194 = ssub.s32 %s14, 1
        %p195 = scmp.lt.s32.totalorder %s19, 1
        %s196 = scalar_select %p195, %s19, 1
        %s197 = smul.addr %s196, 4
        %s198 = scalar_lea.vmem %s0, %s197
        %p199 = pneg %p40
        %p200 = pneg %p37
        %p201 = pneg %p61
        %p202 = pneg %p58
        %p203 = pneg %p82
        %p204 = pneg %p79
        %p205 = pneg %p103
        %p206 = pneg %p100
        %p207 = pneg %p124
        %p208 = pneg %p121
        %p209 = pneg %p150
        %p210 = pneg %p147
        %s211 = sand.u32 %s137, 1
        %s212 = scalar_lea.sflag [#allocation3], %s211
        %s213 = sand.u32 %s137, 1
        %s214 = smul.addr %s213, 32
        %s215 = scalar_lea.vmem [#allocation2], %s214
        %p216 = scmp.lt.s32.totalorder %s19, 1
        %s217 = scalar_select %p216, %s19, 1
        %s218 = smul.addr %s217, 4
        %s219 = scalar_lea.vmem %s0, %s218
        %v221 = vld [vmem:[%s219] sm:$0xf]
        %v222 = vld [vmem:[%s1] sm:$0xff]
        %v223 = vld [vmem:[%s1 + $0x8] sm:$0xff]
        %v224 = vld [vmem:[%s1 + $0x10] sm:$0xff]
        %v225 = vld [vmem:[%s1 + $0x18] sm:$0xff]
        %v226 = vld [vmem:[%s1 + $0x20] sm:$0xff]
        %v227 = vld [vmem:[%s1 + $0x28] sm:$0xff]
        %v228 = vld [vmem:[%s1 + $0x30] sm:$0xff]
        %v229 = vld [vmem:[%s1 + $0x38] sm:$0xff]
        %v230 = vld [vmem:[%s2] sm:$0xf]
        %v232 = vlaneseq
        %v233 = vshrl.u32 %v232, 7
        %v234 = vsub.s32 0, %v233
        %v235 = vrot.slane %v230, %v234
        %v236 = vlaneseq
        %v237 = vshrl.u32 %v236, 7
        %v238 = vsub.s32 1, %v237
        %v239 = vrot.slane %v230, %v238
        %v240 = vlaneseq
        %v241 = vshrl.u32 %v240, 7
        %v242 = vsub.s32 2, %v241
        %v243 = vrot.slane %v230, %v242
        %v244 = vlaneseq
        %v245 = vshrl.u32 %v244, 7
        %v246 = vsub.s32 3, %v245
        %v247 = vrot.slane %v230, %v246
        %v260 = vunpack.c.l.b16 %v222
        %v261 = vunpack.c.h.b16 %v222
        %v262 = vunpack.c.l.b16 %v223
        %v263 = vunpack.c.h.b16 %v223
        %v264 = vunpack.c.l.b16 %v224
        %v265 = vunpack.c.h.b16 %v224
        %v266 = vunpack.c.l.b16 %v225
        %v267 = vunpack.c.h.b16 %v225
        %v268 = vunpack.c.l.b16 %v226
        %v269 = vunpack.c.h.b16 %v226
        %v270 = vunpack.c.l.b16 %v227
        %v271 = vunpack.c.h.b16 %v227
        %v272 = vunpack.c.l.b16 %v228
        %v273 = vunpack.c.h.b16 %v228
        %v274 = vunpack.c.l.b16 %v229
        %v275 = vunpack.c.h.b16 %v229
        %v276 = vpack.c.b16 %v264, %v260
        %v277 = vpack.c.b16 %v265, %v261
        %v278 = vpack.c.b16 %v266, %v262
        %v279 = vpack.c.b16 %v267, %v263
        %v280 = vpack.c.b16 %v272, %v268
        %v281 = vpack.c.b16 %v273, %v269
        %v282 = vpack.c.b16 %v274, %v270
        %v283 = vpack.c.b16 %v275, %v271
        %vm292 = vcmask 261120
        %v294 = vsel %vm292, %v221, 0
        %296 = vmatprep.subr.bf16.mxu0 %v277
        %297 = vmatpush1.bf16.msra.mxu0 %v276
        %298 = vmatprep.subr.bf16.mxu0 %v281
        %299 = vmatpush1.bf16.msra.mxu0 %v280
        %300 = vmatprep.subr.bf16.mxu0 0
        %301 = vmatpush1.bf16.msra.mxu0 0
        %302 = vmatprep.subr.bf16.mxu0 0
        %303 = vmatpush1.bf16.msra.mxu0 0
        %304 = vmatprep.subr.bf16.mxu0 0
        %305 = vmatpush1.bf16.msra.mxu0 0
        %306 = vmatprep.subr.bf16.mxu0 0
        %307 = vmatpush1.bf16.msra.mxu0 0
        %308 = vmatprep.subr.bf16.mxu0 0
        %309 = vmatpush1.bf16.msra.mxu0 0
        %310 = vmatprep.subr.bf16.mxu0 0
        %311 = vmatpush1.bf16.msra.mxu0 0
        %312 = vmatprep.subr.bf16.mxu0 0
        %313 = vmatpush1.bf16.msra.mxu0 0
        %314 = vmatprep.subr.bf16.mxu0 0
        %315 = vmatpush1.bf16.msra.mxu0 0
        %316 = vmatprep.subr.bf16.mxu0 0
        %317 = vmatpush1.bf16.msra.mxu0 0
        %318 = vmatprep.subr.bf16.mxu0 0
        %319 = vmatpush1.bf16.msra.mxu0 0
        %320 = vmatprep.subr.bf16.mxu0 0
        %321 = vmatpush1.bf16.msra.mxu0 0
        %322 = vmatprep.subr.bf16.mxu0 0
        %323 = vmatpush1.bf16.msra.mxu0 0
        %324 = vmatprep.subr.bf16.mxu0 0
        %325 = vmatpush1.bf16.msra.mxu0 0
        %326 = vmatprep.subr.bf16.mxu0 0
        %327 = vmatpush1.bf16.msra.mxu0 0
        %328 = vmatprep.mubr.bf16.mxu0 0
        %329 = vmatmul.mubr.bf16.gmra.mrb[0].mxu0 %v294
        %v330 = vpop.f32.mrb[0].mxu0
        %v331 = vadd.f32 %v235, %v330
        %v332 = vpop.f32.mrb[0].mxu0
        %v333 = vadd.f32 %v239, %v332
        %v334 = vpop.f32.mrb[0].mxu0
        %v335 = vpop.f32.mrb[0].mxu0
        %336 = vdwg.mxu0
        %337 = vmatprep.subr.bf16.mxu0 %v279
        %338 = vmatpush1.bf16.msra.mxu0 %v278
        %339 = vmatprep.subr.bf16.mxu0 %v283
        %340 = vmatpush1.bf16.msra.mxu0 %v282
        %341 = vmatprep.subr.bf16.mxu0 0
        %342 = vmatpush1.bf16.msra.mxu0 0
        %343 = vmatprep.subr.bf16.mxu0 0
        %344 = vmatpush1.bf16.msra.mxu0 0
        %345 = vmatprep.subr.bf16.mxu0 0
        %346 = vmatpush1.bf16.msra.mxu0 0
        %347 = vmatprep.subr.bf16.mxu0 0
        %348 = vmatpush1.bf16.msra.mxu0 0
        %349 = vmatprep.subr.bf16.mxu0 0
        %350 = vmatpush1.bf16.msra.mxu0 0
        %351 = vmatprep.subr.bf16.mxu0 0
        %352 = vmatpush1.bf16.msra.mxu0 0
        %353 = vmatprep.subr.bf16.mxu0 0
        %354 = vmatpush1.bf16.msra.mxu0 0
        %355 = vmatprep.subr.bf16.mxu0 0
        %356 = vmatpush1.bf16.msra.mxu0 0
        %357 = vmatprep.subr.bf16.mxu0 0
        %358 = vmatpush1.bf16.msra.mxu0 0
        %359 = vmatprep.subr.bf16.mxu0 0
        %360 = vmatpush1.bf16.msra.mxu0 0
        %361 = vmatprep.subr.bf16.mxu0 0
        %362 = vmatpush1.bf16.msra.mxu0 0
        %363 = vmatprep.subr.bf16.mxu0 0
        %364 = vmatpush1.bf16.msra.mxu0 0
        %365 = vmatprep.subr.bf16.mxu0 0
        %366 = vmatpush1.bf16.msra.mxu0 0
        %367 = vmatprep.subr.bf16.mxu0 0
        %368 = vmatpush1.bf16.msra.mxu0 0
        %369 = vmatprep.mubr.bf16.mxu0 0
        %370 = vmatmul.mubr.bf16.gmra.mrb[0].mxu0 %v294
        %v371 = vpop.f32.mrb[0].mxu0
        %v372 = vadd.f32 %v243, %v371
        %v373 = vpop.f32.mrb[0].mxu0
        %v374 = vadd.f32 %v247, %v373
        %v375 = vpop.f32.mrb[0].mxu0
        %v376 = vpop.f32.mrb[0].mxu0
        %377 = vdwg.mxu0
        %v378 = vmax.f32 %v331, 0.0
        %v379 = vmax.f32 %v333, 0.0
        %v380 = vmax.f32 %v372, 0.0
        %v381 = vmax.f32 %v374, 0.0
        %v382 = vpack.c.bf16 %v378, %v378
        %v383 = vpack.c.bf16 %v379, %v379
        %v384 = vpack.c.bf16 %v380, %v380
        %v385 = vpack.c.bf16 %v381, %v381
        %v386 = vld [vmem:[%s3] sm:$0xff]
        %v387 = vld [vmem:[%s3 + $0x8] sm:$0xff]
        %v388 = vld [vmem:[%s3 + $0x10] sm:$0xff]
        %v389 = vld [vmem:[%s3 + $0x18] sm:$0xff]
        %v390 = vld [vmem:[%s3 + $0x20] sm:$0xff]
        %v391 = vld [vmem:[%s3 + $0x28] sm:$0xff]
        %v392 = vld [vmem:[%s3 + $0x30] sm:$0xff]
        %v393 = vld [vmem:[%s3 + $0x38] sm:$0xff]
        %v394 = vld [vmem:[%s3 + $0x40] sm:$0xff]
        %v395 = vld [vmem:[%s3 + $0x48] sm:$0xff]
        %v396 = vld [vmem:[%s3 + $0x50] sm:$0xff]
        %v397 = vld [vmem:[%s3 + $0x58] sm:$0xff]
        %v398 = vld [vmem:[%s3 + $0x60] sm:$0xff]
        %v399 = vld [vmem:[%s3 + $0x68] sm:$0xff]
        %v400 = vld [vmem:[%s3 + $0x70] sm:$0xff]
        %v401 = vld [vmem:[%s3 + $0x78] sm:$0xff]
        %v402 = vld [vmem:[%s3 + $0x80] sm:$0xff]
        %v403 = vld [vmem:[%s3 + $0x88] sm:$0xff]
        %v404 = vld [vmem:[%s3 + $0x90] sm:$0xff]
        %v405 = vld [vmem:[%s3 + $0x98] sm:$0xff]
        %v406 = vld [vmem:[%s3 + $0xa0] sm:$0xff]
        %v407 = vld [vmem:[%s3 + $0xa8] sm:$0xff]
        %v408 = vld [vmem:[%s3 + $0xb0] sm:$0xff]
        %v409 = vld [vmem:[%s3 + $0xb8] sm:$0xff]
        %v410 = vld [vmem:[%s3 + $0xc0] sm:$0xff]
        %v411 = vld [vmem:[%s3 + $0xc8] sm:$0xff]
        %v412 = vld [vmem:[%s3 + $0xd0] sm:$0xff]
        %v413 = vld [vmem:[%s3 + $0xd8] sm:$0xff]
        %v414 = vld [vmem:[%s3 + $0xe0] sm:$0xff]
        %v415 = vld [vmem:[%s3 + $0xe8] sm:$0xff]
        %v416 = vld [vmem:[%s3 + $0xf0] sm:$0xff]
        %v417 = vld [vmem:[%s3 + $0xf8] sm:$0xff]
        %v418 = vld [vmem:[%s3 + $0x100] sm:$0xff]
        %v419 = vld [vmem:[%s3 + $0x108] sm:$0xff]
        %v420 = vld [vmem:[%s3 + $0x110] sm:$0xff]
        %v421 = vld [vmem:[%s3 + $0x118] sm:$0xff]
        %v422 = vld [vmem:[%s3 + $0x120] sm:$0xff]
        %v423 = vld [vmem:[%s3 + $0x128] sm:$0xff]
        %v424 = vld [vmem:[%s3 + $0x130] sm:$0xff]
        %v425 = vld [vmem:[%s3 + $0x138] sm:$0xff]
        %v426 = vld [vmem:[%s3 + $0x140] sm:$0xff]
        %v427 = vld [vmem:[%s3 + $0x148] sm:$0xff]
        %v428 = vld [vmem:[%s3 + $0x150] sm:$0xff]
        %v429 = vld [vmem:[%s3 + $0x158] sm:$0xff]
        %v430 = vld [vmem:[%s3 + $0x160] sm:$0xff]
        %v431 = vld [vmem:[%s3 + $0x168] sm:$0xff]
        %v432 = vld [vmem:[%s3 + $0x170] sm:$0xff]
        %v433 = vld [vmem:[%s3 + $0x178] sm:$0xff]
        %v434 = vld [vmem:[%s3 + $0x180] sm:$0xff]
        %v435 = vld [vmem:[%s3 + $0x188] sm:$0xff]
        %v436 = vld [vmem:[%s3 + $0x190] sm:$0xff]
        %v437 = vld [vmem:[%s3 + $0x198] sm:$0xff]
        %v438 = vld [vmem:[%s3 + $0x1a0] sm:$0xff]
        %v439 = vld [vmem:[%s3 + $0x1a8] sm:$0xff]
        %v440 = vld [vmem:[%s3 + $0x1b0] sm:$0xff]
        %v441 = vld [vmem:[%s3 + $0x1b8] sm:$0xff]
        %v442 = vld [vmem:[%s3 + $0x1c0] sm:$0xff]
        %v443 = vld [vmem:[%s3 + $0x1c8] sm:$0xff]
        %v444 = vld [vmem:[%s3 + $0x1d0] sm:$0xff]
        %v445 = vld [vmem:[%s3 + $0x1d8] sm:$0xff]
        %v446 = vld [vmem:[%s3 + $0x1e0] sm:$0xff]
        %v447 = vld [vmem:[%s3 + $0x1e8] sm:$0xff]
        %v448 = vld [vmem:[%s3 + $0x1f0] sm:$0xff]
        %v449 = vld [vmem:[%s3 + $0x1f8] sm:$0xff]
        %v450 = vld [vmem:[%s3 + $0x200] sm:$0xff]
        %v451 = vld [vmem:[%s3 + $0x208] sm:$0xff]
        %v452 = vld [vmem:[%s3 + $0x210] sm:$0xff]
        %v453 = vld [vmem:[%s3 + $0x218] sm:$0xff]
        %v454 = vld [vmem:[%s3 + $0x220] sm:$0xff]
        %v455 = vld [vmem:[%s3 + $0x228] sm:$0xff]
        %v456 = vld [vmem:[%s3 + $0x230] sm:$0xff]
        %v457 = vld [vmem:[%s3 + $0x238] sm:$0xff]
        %v458 = vld [vmem:[%s3 + $0x240] sm:$0xff]
        %v459 = vld [vmem:[%s3 + $0x248] sm:$0xff]
        %v460 = vld [vmem:[%s3 + $0x250] sm:$0xff]
        %v461 = vld [vmem:[%s3 + $0x258] sm:$0xff]
        %v462 = vld [vmem:[%s3 + $0x260] sm:$0xff]
        %v463 = vld [vmem:[%s3 + $0x268] sm:$0xff]
        %v464 = vld [vmem:[%s3 + $0x270] sm:$0xff]
        %v465 = vld [vmem:[%s3 + $0x278] sm:$0xff]
        %v466 = vld [vmem:[%s3 + $0x280] sm:$0xff]
        %v467 = vld [vmem:[%s3 + $0x288] sm:$0xff]
        %v468 = vld [vmem:[%s3 + $0x290] sm:$0xff]
        %v469 = vld [vmem:[%s3 + $0x298] sm:$0xff]
        %v470 = vld [vmem:[%s3 + $0x2a0] sm:$0xff]
        %v471 = vld [vmem:[%s3 + $0x2a8] sm:$0xff]
        %v472 = vld [vmem:[%s3 + $0x2b0] sm:$0xff]
        %v473 = vld [vmem:[%s3 + $0x2b8] sm:$0xff]
        %v474 = vld [vmem:[%s3 + $0x2c0] sm:$0xff]
        %v475 = vld [vmem:[%s3 + $0x2c8] sm:$0xff]
        %v476 = vld [vmem:[%s3 + $0x2d0] sm:$0xff]
        %v477 = vld [vmem:[%s3 + $0x2d8] sm:$0xff]
        %v478 = vld [vmem:[%s3 + $0x2e0] sm:$0xff]
        %v479 = vld [vmem:[%s3 + $0x2e8] sm:$0xff]
        %v480 = vld [vmem:[%s3 + $0x2f0] sm:$0xff]
        %v481 = vld [vmem:[%s3 + $0x2f8] sm:$0xff]
        %v482 = vld [vmem:[%s3 + $0x300] sm:$0xff]
        %v483 = vld [vmem:[%s3 + $0x308] sm:$0xff]
        %v484 = vld [vmem:[%s3 + $0x310] sm:$0xff]
        %v485 = vld [vmem:[%s3 + $0x318] sm:$0xff]
        %v486 = vld [vmem:[%s3 + $0x320] sm:$0xff]
        %v487 = vld [vmem:[%s3 + $0x328] sm:$0xff]
        %v488 = vld [vmem:[%s3 + $0x330] sm:$0xff]
        %v489 = vld [vmem:[%s3 + $0x338] sm:$0xff]
        %v490 = vld [vmem:[%s3 + $0x340] sm:$0xff]
        %v491 = vld [vmem:[%s3 + $0x348] sm:$0xff]
        %v492 = vld [vmem:[%s3 + $0x350] sm:$0xff]
        %v493 = vld [vmem:[%s3 + $0x358] sm:$0xff]
        %v494 = vld [vmem:[%s3 + $0x360] sm:$0xff]
        %v495 = vld [vmem:[%s3 + $0x368] sm:$0xff]
        %v496 = vld [vmem:[%s3 + $0x370] sm:$0xff]
        %v497 = vld [vmem:[%s3 + $0x378] sm:$0xff]
        %v498 = vld [vmem:[%s3 + $0x380] sm:$0xff]
        %v499 = vld [vmem:[%s3 + $0x388] sm:$0xff]
        %v500 = vld [vmem:[%s3 + $0x390] sm:$0xff]
        %v501 = vld [vmem:[%s3 + $0x398] sm:$0xff]
        %v502 = vld [vmem:[%s3 + $0x3a0] sm:$0xff]
        %v503 = vld [vmem:[%s3 + $0x3a8] sm:$0xff]
        %v504 = vld [vmem:[%s3 + $0x3b0] sm:$0xff]
        %v505 = vld [vmem:[%s3 + $0x3b8] sm:$0xff]
        %v506 = vld [vmem:[%s3 + $0x3c0] sm:$0xff]
        %v507 = vld [vmem:[%s3 + $0x3c8] sm:$0xff]
        %v508 = vld [vmem:[%s3 + $0x3d0] sm:$0xff]
        %v509 = vld [vmem:[%s3 + $0x3d8] sm:$0xff]
        %v510 = vld [vmem:[%s3 + $0x3e0] sm:$0xff]
        %v511 = vld [vmem:[%s3 + $0x3e8] sm:$0xff]
        %v512 = vld [vmem:[%s3 + $0x3f0] sm:$0xff]
        %v513 = vld [vmem:[%s3 + $0x3f8] sm:$0xff]
        %v514 = vld [vmem:[%s4] sm:$0xf]
        %v516 = vlaneseq
        %v517 = vshrl.u32 %v516, 7
        %v518 = vsub.s32 0, %v517
        %v519 = vrot.slane %v514, %v518
        %v520 = vlaneseq
        %v521 = vshrl.u32 %v520, 7
        %v522 = vsub.s32 1, %v521
        %v523 = vrot.slane %v514, %v522
        %v524 = vlaneseq
        %v525 = vshrl.u32 %v524, 7
        %v526 = vsub.s32 2, %v525
        %v527 = vrot.slane %v514, %v526
        %v528 = vlaneseq
        %v529 = vshrl.u32 %v528, 7
        %v530 = vsub.s32 3, %v529
        %v531 = vrot.slane %v514, %v530
        %v664 = vunpack.c.l.b16 %v386
        %v665 = vunpack.c.h.b16 %v386
        %v666 = vunpack.c.l.b16 %v387
        %v667 = vunpack.c.h.b16 %v387
        %v668 = vunpack.c.l.b16 %v388
        %v669 = vunpack.c.h.b16 %v388
        %v670 = vunpack.c.l.b16 %v389
        %v671 = vunpack.c.h.b16 %v389
        %v672 = vunpack.c.l.b16 %v390
        %v673 = vunpack.c.h.b16 %v390
        %v674 = vunpack.c.l.b16 %v391
        %v675 = vunpack.c.h.b16 %v391
        %v676 = vunpack.c.l.b16 %v392
        %v677 = vunpack.c.h.b16 %v392
        %v678 = vunpack.c.l.b16 %v393
        %v679 = vunpack.c.h.b16 %v393
        %v680 = vunpack.c.l.b16 %v394
        %v681 = vunpack.c.h.b16 %v394
        %v682 = vunpack.c.l.b16 %v395
        %v683 = vunpack.c.h.b16 %v395
        %v684 = vunpack.c.l.b16 %v396
        %v685 = vunpack.c.h.b16 %v396
        %v686 = vunpack.c.l.b16 %v397
        %v687 = vunpack.c.h.b16 %v397
        %v688 = vunpack.c.l.b16 %v398
        %v689 = vunpack.c.h.b16 %v398
        %v690 = vunpack.c.l.b16 %v399
        %v691 = vunpack.c.h.b16 %v399
        %v692 = vunpack.c.l.b16 %v400
        %v693 = vunpack.c.h.b16 %v400
        %v694 = vunpack.c.l.b16 %v401
        %v695 = vunpack.c.h.b16 %v401
        %v696 = vunpack.c.l.b16 %v402
        %v697 = vunpack.c.h.b16 %v402
        %v698 = vunpack.c.l.b16 %v403
        %v699 = vunpack.c.h.b16 %v403
        %v700 = vunpack.c.l.b16 %v404
        %v701 = vunpack.c.h.b16 %v404
        %v702 = vunpack.c.l.b16 %v405
        %v703 = vunpack.c.h.b16 %v405
        %v704 = vunpack.c.l.b16 %v406
        %v705 = vunpack.c.h.b16 %v406
        %v706 = vunpack.c.l.b16 %v407
        %v707 = vunpack.c.h.b16 %v407
        %v708 = vunpack.c.l.b16 %v408
        %v709 = vunpack.c.h.b16 %v408
        %v710 = vunpack.c.l.b16 %v409
        %v711 = vunpack.c.h.b16 %v409
        %v712 = vunpack.c.l.b16 %v410
        %v713 = vunpack.c.h.b16 %v410
        %v714 = vunpack.c.l.b16 %v411
        %v715 = vunpack.c.h.b16 %v411
        %v716 = vunpack.c.l.b16 %v412
        %v717 = vunpack.c.h.b16 %v412
        %v718 = vunpack.c.l.b16 %v413
        %v719 = vunpack.c.h.b16 %v413
        %v720 = vunpack.c.l.b16 %v414
        %v721 = vunpack.c.h.b16 %v414
        %v722 = vunpack.c.l.b16 %v415
        %v723 = vunpack.c.h.b16 %v415
        %v724 = vunpack.c.l.b16 %v416
        %v725 = vunpack.c.h.b16 %v416
        %v726 = vunpack.c.l.b16 %v417
        %v727 = vunpack.c.h.b16 %v417
        %v728 = vunpack.c.l.b16 %v418
        %v729 = vunpack.c.h.b16 %v418
        %v730 = vunpack.c.l.b16 %v419
        %v731 = vunpack.c.h.b16 %v419
        %v732 = vunpack.c.l.b16 %v420
        %v733 = vunpack.c.h.b16 %v420
        %v734 = vunpack.c.l.b16 %v421
        %v735 = vunpack.c.h.b16 %v421
        %v736 = vunpack.c.l.b16 %v422
        %v737 = vunpack.c.h.b16 %v422
        %v738 = vunpack.c.l.b16 %v423
        %v739 = vunpack.c.h.b16 %v423
        %v740 = vunpack.c.l.b16 %v424
        %v741 = vunpack.c.h.b16 %v424
        %v742 = vunpack.c.l.b16 %v425
        %v743 = vunpack.c.h.b16 %v425
        %v744 = vunpack.c.l.b16 %v426
        %v745 = vunpack.c.h.b16 %v426
        %v746 = vunpack.c.l.b16 %v427
        %v747 = vunpack.c.h.b16 %v427
        %v748 = vunpack.c.l.b16 %v428
        %v749 = vunpack.c.h.b16 %v428
        %v750 = vunpack.c.l.b16 %v429
        %v751 = vunpack.c.h.b16 %v429
        %v752 = vunpack.c.l.b16 %v430
        %v753 = vunpack.c.h.b16 %v430
        %v754 = vunpack.c.l.b16 %v431
        %v755 = vunpack.c.h.b16 %v431
        %v756 = vunpack.c.l.b16 %v432
        %v757 = vunpack.c.h.b16 %v432
        %v758 = vunpack.c.l.b16 %v433
        %v759 = vunpack.c.h.b16 %v433
        %v760 = vunpack.c.l.b16 %v434
        %v761 = vunpack.c.h.b16 %v434
        %v762 = vunpack.c.l.b16 %v435
        %v763 = vunpack.c.h.b16 %v435
        %v764 = vunpack.c.l.b16 %v436
        %v765 = vunpack.c.h.b16 %v436
        %v766 = vunpack.c.l.b16 %v437
        %v767 = vunpack.c.h.b16 %v437
        %v768 = vunpack.c.l.b16 %v438
        %v769 = vunpack.c.h.b16 %v438
        %v770 = vunpack.c.l.b16 %v439
        %v771 = vunpack.c.h.b16 %v439
        %v772 = vunpack.c.l.b16 %v440
        %v773 = vunpack.c.h.b16 %v440
        %v774 = vunpack.c.l.b16 %v441
        %v775 = vunpack.c.h.b16 %v441
        %v776 = vunpack.c.l.b16 %v442
        %v777 = vunpack.c.h.b16 %v442
        %v778 = vunpack.c.l.b16 %v443
        %v779 = vunpack.c.h.b16 %v443
        %v780 = vunpack.c.l.b16 %v444
        %v781 = vunpack.c.h.b16 %v444
        %v782 = vunpack.c.l.b16 %v445
        %v783 = vunpack.c.h.b16 %v445
        %v784 = vunpack.c.l.b16 %v446
        %v785 = vunpack.c.h.b16 %v446
        %v786 = vunpack.c.l.b16 %v447
        %v787 = vunpack.c.h.b16 %v447
        %v788 = vunpack.c.l.b16 %v448
        %v789 = vunpack.c.h.b16 %v448
        %v790 = vunpack.c.l.b16 %v449
        %v791 = vunpack.c.h.b16 %v449
        %v792 = vunpack.c.l.b16 %v450
        %v793 = vunpack.c.h.b16 %v450
        %v794 = vunpack.c.l.b16 %v451
        %v795 = vunpack.c.h.b16 %v451
        %v796 = vunpack.c.l.b16 %v452
        %v797 = vunpack.c.h.b16 %v452
        %v798 = vunpack.c.l.b16 %v453
        %v799 = vunpack.c.h.b16 %v453
        %v800 = vunpack.c.l.b16 %v454
        %v801 = vunpack.c.h.b16 %v454
        %v802 = vunpack.c.l.b16 %v455
        %v803 = vunpack.c.h.b16 %v455
        %v804 = vunpack.c.l.b16 %v456
        %v805 = vunpack.c.h.b16 %v456
        %v806 = vunpack.c.l.b16 %v457
        %v807 = vunpack.c.h.b16 %v457
        %v808 = vunpack.c.l.b16 %v458
        %v809 = vunpack.c.h.b16 %v458
        %v810 = vunpack.c.l.b16 %v459
        %v811 = vunpack.c.h.b16 %v459
        %v812 = vunpack.c.l.b16 %v460
        %v813 = vunpack.c.h.b16 %v460
        %v814 = vunpack.c.l.b16 %v461
        %v815 = vunpack.c.h.b16 %v461
        %v816 = vunpack.c.l.b16 %v462
        %v817 = vunpack.c.h.b16 %v462
        %v818 = vunpack.c.l.b16 %v463
        %v819 = vunpack.c.h.b16 %v463
        %v820 = vunpack.c.l.b16 %v464
        %v821 = vunpack.c.h.b16 %v464
        %v822 = vunpack.c.l.b16 %v465
        %v823 = vunpack.c.h.b16 %v465
        %v824 = vunpack.c.l.b16 %v466
        %v825 = vunpack.c.h.b16 %v466
        %v826 = vunpack.c.l.b16 %v467
        %v827 = vunpack.c.h.b16 %v467
        %v828 = vunpack.c.l.b16 %v468
        %v829 = vunpack.c.h.b16 %v468
        %v830 = vunpack.c.l.b16 %v469
        %v831 = vunpack.c.h.b16 %v469
        %v832 = vunpack.c.l.b16 %v470
        %v833 = vunpack.c.h.b16 %v470
        %v834 = vunpack.c.l.b16 %v471
        %v835 = vunpack.c.h.b16 %v471
        %v836 = vunpack.c.l.b16 %v472
        %v837 = vunpack.c.h.b16 %v472
        %v838 = vunpack.c.l.b16 %v473
        %v839 = vunpack.c.h.b16 %v473
        %v840 = vunpack.c.l.b16 %v474
        %v841 = vunpack.c.h.b16 %v474
        %v842 = vunpack.c.l.b16 %v475
        %v843 = vunpack.c.h.b16 %v475
        %v844 = vunpack.c.l.b16 %v476
        %v845 = vunpack.c.h.b16 %v476
        %v846 = vunpack.c.l.b16 %v477
        %v847 = vunpack.c.h.b16 %v477
        %v848 = vunpack.c.l.b16 %v478
        %v849 = vunpack.c.h.b16 %v478
        %v850 = vunpack.c.l.b16 %v479
        %v851 = vunpack.c.h.b16 %v479
        %v852 = vunpack.c.l.b16 %v480
        %v853 = vunpack.c.h.b16 %v480
        %v854 = vunpack.c.l.b16 %v481
        %v855 = vunpack.c.h.b16 %v481
        %v856 = vunpack.c.l.b16 %v482
        %v857 = vunpack.c.h.b16 %v482
        %v858 = vunpack.c.l.b16 %v483
        %v859 = vunpack.c.h.b16 %v483
        %v860 = vunpack.c.l.b16 %v484
        %v861 = vunpack.c.h.b16 %v484
        %v862 = vunpack.c.l.b16 %v485
        %v863 = vunpack.c.h.b16 %v485
        %v864 = vunpack.c.l.b16 %v486
        %v865 = vunpack.c.h.b16 %v486
        %v866 = vunpack.c.l.b16 %v487
        %v867 = vunpack.c.h.b16 %v487
        %v868 = vunpack.c.l.b16 %v488
        %v869 = vunpack.c.h.b16 %v488
        %v870 = vunpack.c.l.b16 %v489
        %v871 = vunpack.c.h.b16 %v489
        %v872 = vunpack.c.l.b16 %v490
        %v873 = vunpack.c.h.b16 %v490
        %v874 = vunpack.c.l.b16 %v491
        %v875 = vunpack.c.h.b16 %v491
        %v876 = vunpack.c.l.b16 %v492
        %v877 = vunpack.c.h.b16 %v492
        %v878 = vunpack.c.l.b16 %v493
        %v879 = vunpack.c.h.b16 %v493
        %v880 = vunpack.c.l.b16 %v494
        %v881 = vunpack.c.h.b16 %v494
        %v882 = vunpack.c.l.b16 %v495
        %v883 = vunpack.c.h.b16 %v495
        %v884 = vunpack.c.l.b16 %v496
        %v885 = vunpack.c.h.b16 %v496
        %v886 = vunpack.c.l.b16 %v497
        %v887 = vunpack.c.h.b16 %v497
        %v888 = vunpack.c.l.b16 %v498
        %v889 = vunpack.c.h.b16 %v498
        %v890 = vunpack.c.l.b16 %v499
        %v891 = vunpack.c.h.b16 %v499
        %v892 = vunpack.c.l.b16 %v500
        %v893 = vunpack.c.h.b16 %v500
        %v894 = vunpack.c.l.b16 %v501
        %v895 = vunpack.c.h.b16 %v501
        %v896 = vunpack.c.l.b16 %v502
        %v897 = vunpack.c.h.b16 %v502
        %v898 = vunpack.c.l.b16 %v503
        %v899 = vunpack.c.h.b16 %v503
        %v900 = vunpack.c.l.b16 %v504
        %v901 = vunpack.c.h.b16 %v504
        %v902 = vunpack.c.l.b16 %v505
        %v903 = vunpack.c.h.b16 %v505
        %v904 = vunpack.c.l.b16 %v506
        %v905 = vunpack.c.h.b16 %v506
        %v906 = vunpack.c.l.b16 %v507
        %v907 = vunpack.c.h.b16 %v507
        %v908 = vunpack.c.l.b16 %v508
        %v909 = vunpack.c.h.b16 %v508
        %v910 = vunpack.c.l.b16 %v509
        %v911 = vunpack.c.h.b16 %v509
        %v912 = vunpack.c.l.b16 %v510
        %v913 = vunpack.c.h.b16 %v510
        %v914 = vunpack.c.l.b16 %v511
        %v915 = vunpack.c.h.b16 %v511
        %v916 = vunpack.c.l.b16 %v512
        %v917 = vunpack.c.h.b16 %v512
        %v918 = vunpack.c.l.b16 %v513
        %v919 = vunpack.c.h.b16 %v513
        %v920 = vpack.c.b16 %v668, %v664
        %v921 = vpack.c.b16 %v669, %v665
        %v922 = vpack.c.b16 %v670, %v666
        %v923 = vpack.c.b16 %v671, %v667
        %v924 = vpack.c.b16 %v676, %v672
        %v925 = vpack.c.b16 %v677, %v673
        %v926 = vpack.c.b16 %v678, %v674
        %v927 = vpack.c.b16 %v679, %v675
        %v928 = vpack.c.b16 %v684, %v680
        %v929 = vpack.c.b16 %v685, %v681
        %v930 = vpack.c.b16 %v686, %v682
        %v931 = vpack.c.b16 %v687, %v683
        %v932 = vpack.c.b16 %v692, %v688
        %v933 = vpack.c.b16 %v693, %v689
        %v934 = vpack.c.b16 %v694, %v690
        %v935 = vpack.c.b16 %v695, %v691
        %v936 = vpack.c.b16 %v700, %v696
        %v937 = vpack.c.b16 %v701, %v697
        %v938 = vpack.c.b16 %v702, %v698
        %v939 = vpack.c.b16 %v703, %v699
        %v940 = vpack.c.b16 %v708, %v704
        %v941 = vpack.c.b16 %v709, %v705
        %v942 = vpack.c.b16 %v710, %v706
        %v943 = vpack.c.b16 %v711, %v707
        %v944 = vpack.c.b16 %v716, %v712
        %v945 = vpack.c.b16 %v717, %v713
        %v946 = vpack.c.b16 %v718, %v714
        %v947 = vpack.c.b16 %v719, %v715
        %v948 = vpack.c.b16 %v724, %v720
        %v949 = vpack.c.b16 %v725, %v721
        %v950 = vpack.c.b16 %v726, %v722
        %v951 = vpack.c.b16 %v727, %v723
        %v952 = vpack.c.b16 %v732, %v728
        %v953 = vpack.c.b16 %v733, %v729
        %v954 = vpack.c.b16 %v734, %v730
        %v955 = vpack.c.b16 %v735, %v731
        %v956 = vpack.c.b16 %v740, %v736
        %v957 = vpack.c.b16 %v741, %v737
        %v958 = vpack.c.b16 %v742, %v738
        %v959 = vpack.c.b16 %v743, %v739
        %v960 = vpack.c.b16 %v748, %v744
        %v961 = vpack.c.b16 %v749, %v745
        %v962 = vpack.c.b16 %v750, %v746
        %v963 = vpack.c.b16 %v751, %v747
        %v964 = vpack.c.b16 %v756, %v752
        %v965 = vpack.c.b16 %v757, %v753
        %v966 = vpack.c.b16 %v758, %v754
        %v967 = vpack.c.b16 %v759, %v755
        %v968 = vpack.c.b16 %v764, %v760
        %v969 = vpack.c.b16 %v765, %v761
        %v970 = vpack.c.b16 %v766, %v762
        %v971 = vpack.c.b16 %v767, %v763
        %v972 = vpack.c.b16 %v772, %v768
        %v973 = vpack.c.b16 %v773, %v769
        %v974 = vpack.c.b16 %v774, %v770
        %v975 = vpack.c.b16 %v775, %v771
        %v976 = vpack.c.b16 %v780, %v776
        %v977 = vpack.c.b16 %v781, %v777
        %v978 = vpack.c.b16 %v782, %v778
        %v979 = vpack.c.b16 %v783, %v779
        %v980 = vpack.c.b16 %v788, %v784
        %v981 = vpack.c.b16 %v789, %v785
        %v982 = vpack.c.b16 %v790, %v786
        %v983 = vpack.c.b16 %v791, %v787
        %v984 = vpack.c.b16 %v796, %v792
        %v985 = vpack.c.b16 %v797, %v793
        %v986 = vpack.c.b16 %v798, %v794
        %v987 = vpack.c.b16 %v799, %v795
        %v988 = vpack.c.b16 %v804, %v800
        %v989 = vpack.c.b16 %v805, %v801
        %v990 = vpack.c.b16 %v806, %v802
        %v991 = vpack.c.b16 %v807, %v803
        %v992 = vpack.c.b16 %v812, %v808
        %v993 = vpack.c.b16 %v813, %v809
        %v994 = vpack.c.b16 %v814, %v810
        %v995 = vpack.c.b16 %v815, %v811
        %v996 = vpack.c.b16 %v820, %v816
        %v997 = vpack.c.b16 %v821, %v817
        %v998 = vpack.c.b16 %v822, %v818
        %v999 = vpack.c.b16 %v823, %v819
        %v1000 = vpack.c.b16 %v828, %v824
        %v1001 = vpack.c.b16 %v829, %v825
        %v1002 = vpack.c.b16 %v830, %v826
        %v1003 = vpack.c.b16 %v831, %v827
        %v1004 = vpack.c.b16 %v836, %v832
        %v1005 = vpack.c.b16 %v837, %v833
        %v1006 = vpack.c.b16 %v838, %v834
        %v1007 = vpack.c.b16 %v839, %v835
        %v1008 = vpack.c.b16 %v844, %v840
        %v1009 = vpack.c.b16 %v845, %v841
        %v1010 = vpack.c.b16 %v846, %v842
        %v1011 = vpack.c.b16 %v847, %v843
        %v1012 = vpack.c.b16 %v852, %v848
        %v1013 = vpack.c.b16 %v853, %v849
        %v1014 = vpack.c.b16 %v854, %v850
        %v1015 = vpack.c.b16 %v855, %v851
        %v1016 = vpack.c.b16 %v860, %v856
        %v1017 = vpack.c.b16 %v861, %v857
        %v1018 = vpack.c.b16 %v862, %v858
        %v1019 = vpack.c.b16 %v863, %v859
        %v1020 = vpack.c.b16 %v868, %v864
        %v1021 = vpack.c.b16 %v869, %v865
        %v1022 = vpack.c.b16 %v870, %v866
        %v1023 = vpack.c.b16 %v871, %v867
        %v1024 = vpack.c.b16 %v876, %v872
        %v1025 = vpack.c.b16 %v877, %v873
        %v1026 = vpack.c.b16 %v878, %v874
        %v1027 = vpack.c.b16 %v879, %v875
        %v1028 = vpack.c.b16 %v884, %v880
        %v1029 = vpack.c.b16 %v885, %v881
        %v1030 = vpack.c.b16 %v886, %v882
        %v1031 = vpack.c.b16 %v887, %v883
        %v1032 = vpack.c.b16 %v892, %v888
        %v1033 = vpack.c.b16 %v893, %v889
        %v1034 = vpack.c.b16 %v894, %v890
        %v1035 = vpack.c.b16 %v895, %v891
        %v1036 = vpack.c.b16 %v900, %v896
        %v1037 = vpack.c.b16 %v901, %v897
        %v1038 = vpack.c.b16 %v902, %v898
        %v1039 = vpack.c.b16 %v903, %v899
        %v1040 = vpack.c.b16 %v908, %v904
        %v1041 = vpack.c.b16 %v909, %v905
        %v1042 = vpack.c.b16 %v910, %v906
        %v1043 = vpack.c.b16 %v911, %v907
        %v1044 = vpack.c.b16 %v916, %v912
        %v1045 = vpack.c.b16 %v917, %v913
        %v1046 = vpack.c.b16 %v918, %v914
        %v1047 = vpack.c.b16 %v919, %v915
        %1176 = vmatprep.subr.bf16.mxu0 %v921
        %1177 = vmatpush1.bf16.msra.mxu0 %v920
        %1178 = vmatprep.subr.bf16.mxu0 %v925
        %1179 = vmatpush1.bf16.msra.mxu0 %v924
        %1180 = vmatprep.subr.bf16.mxu0 %v929
        %1181 = vmatpush1.bf16.msra.mxu0 %v928
        %1182 = vmatprep.subr.bf16.mxu0 %v933
        %1183 = vmatpush1.bf16.msra.mxu0 %v932
        %1184 = vmatprep.subr.bf16.mxu0 %v937
        %1185 = vmatpush1.bf16.msra.mxu0 %v936
        %1186 = vmatprep.subr.bf16.mxu0 %v941
        %1187 = vmatpush1.bf16.msra.mxu0 %v940
        %1188 = vmatprep.subr.bf16.mxu0 %v945
        %1189 = vmatpush1.bf16.msra.mxu0 %v944
        %1190 = vmatprep.subr.bf16.mxu0 %v949
        %1191 = vmatpush1.bf16.msra.mxu0 %v948
        %1192 = vmatprep.subr.bf16.mxu0 %v953
        %1193 = vmatpush1.bf16.msra.mxu0 %v952
        %1194 = vmatprep.subr.bf16.mxu0 %v957
        %1195 = vmatpush1.bf16.msra.mxu0 %v956
        %1196 = vmatprep.subr.bf16.mxu0 %v961
        %1197 = vmatpush1.bf16.msra.mxu0 %v960
        %1198 = vmatprep.subr.bf16.mxu0 %v965
        %1199 = vmatpush1.bf16.msra.mxu0 %v964
        %1200 = vmatprep.subr.bf16.mxu0 %v969
        %1201 = vmatpush1.bf16.msra.mxu0 %v968
        %1202 = vmatprep.subr.bf16.mxu0 %v973
        %1203 = vmatpush1.bf16.msra.mxu0 %v972
        %1204 = vmatprep.subr.bf16.mxu0 %v977
        %1205 = vmatpush1.bf16.msra.mxu0 %v976
        %1206 = vmatprep.subr.bf16.mxu0 %v981
        %1207 = vmatpush1.bf16.msra.mxu0 %v980
        %1208 = vmatprep.mubr.bf16.mxu0 %v383
        %1209 = vmatmul.mubr.bf16.gmra.mrb[0].mxu0 %v382
        %v1210 = vpop.f32.mrb[0].mxu0
        %v1211 = vadd.f32 %v519, %v1210
        %v1212 = vpop.f32.mrb[0].mxu0
        %v1213 = vadd.f32 %v523, %v1212
        %v1214 = vpop.f32.mrb[0].mxu0
        %v1215 = vpop.f32.mrb[0].mxu0
        %1216 = vdwg.mxu0
        %1217 = vmatprep.subr.bf16.mxu0 %v985
        %1218 = vmatpush1.bf16.msra.mxu0 %v984
        %1219 = vmatprep.subr.bf16.mxu0 %v989
        %1220 = vmatpush1.bf16.msra.mxu0 %v988
        %1221 = vmatprep.subr.bf16.mxu0 %v993
        %1222 = vmatpush1.bf16.msra.mxu0 %v992
        %1223 = vmatprep.subr.bf16.mxu0 %v997
        %1224 = vmatpush1.bf16.msra.mxu0 %v996
        %1225 = vmatprep.subr.bf16.mxu0 %v1001
        %1226 = vmatpush1.bf16.msra.mxu0 %v1000
        %1227 = vmatprep.subr.bf16.mxu0 %v1005
        %1228 = vmatpush1.bf16.msra.mxu0 %v1004
        %1229 = vmatprep.subr.bf16.mxu0 %v1009
        %1230 = vmatpush1.bf16.msra.mxu0 %v1008
        %1231 = vmatprep.subr.bf16.mxu0 %v1013
        %1232 = vmatpush1.bf16.msra.mxu0 %v1012
        %1233 = vmatprep.subr.bf16.mxu0 %v1017
        %1234 = vmatpush1.bf16.msra.mxu0 %v1016
        %1235 = vmatprep.subr.bf16.mxu0 %v1021
        %1236 = vmatpush1.bf16.msra.mxu0 %v1020
        %1237 = vmatprep.subr.bf16.mxu0 %v1025
        %1238 = vmatpush1.bf16.msra.mxu0 %v1024
        %1239 = vmatprep.subr.bf16.mxu0 %v1029
        %1240 = vmatpush1.bf16.msra.mxu0 %v1028
        %1241 = vmatprep.subr.bf16.mxu0 %v1033
        %1242 = vmatpush1.bf16.msra.mxu0 %v1032
        %1243 = vmatprep.subr.bf16.mxu0 %v1037
        %1244 = vmatpush1.bf16.msra.mxu0 %v1036
        %1245 = vmatprep.subr.bf16.mxu0 %v1041
        %1246 = vmatpush1.bf16.msra.mxu0 %v1040
        %1247 = vmatprep.subr.bf16.mxu0 %v1045
        %1248 = vmatpush1.bf16.msra.mxu0 %v1044
        %1249 = vmatprep.mubr.bf16.mxu0 %v385
        %1250 = vmatmul.mubr.bf16.gmra.mrb[0].mxu0 %v384
        %v1251 = vpop.f32.mrb[0].mxu0
        %v1252 = vadd.f32 %v1211, %v1251
        %v1253 = vpop.f32.mrb[0].mxu0
        %v1254 = vadd.f32 %v1213, %v1253
        %v1255 = vpop.f32.mrb[0].mxu0
        %v1256 = vpop.f32.mrb[0].mxu0
        %1257 = vdwg.mxu0
        %1258 = vmatprep.subr.bf16.mxu0 %v923
        %1259 = vmatpush1.bf16.msra.mxu0 %v922
        %1260 = vmatprep.subr.bf16.mxu0 %v927
        %1261 = vmatpush1.bf16.msra.mxu0 %v926
        %1262 = vmatprep.subr.bf16.mxu0 %v931
        %1263 = vmatpush1.bf16.msra.mxu0 %v930
        %1264 = vmatprep.subr.bf16.mxu0 %v935
        %1265 = vmatpush1.bf16.msra.mxu0 %v934
        %1266 = vmatprep.subr.bf16.mxu0 %v939
        %1267 = vmatpush1.bf16.msra.mxu0 %v938
        %1268 = vmatprep.subr.bf16.mxu0 %v943
        %1269 = vmatpush1.bf16.msra.mxu0 %v942
        %1270 = vmatprep.subr.bf16.mxu0 %v947
        %1271 = vmatpush1.bf16.msra.mxu0 %v946
        %1272 = vmatprep.subr.bf16.mxu0 %v951
        %1273 = vmatpush1.bf16.msra.mxu0 %v950
        %1274 = vmatprep.subr.bf16.mxu0 %v955
        %1275 = vmatpush1.bf16.msra.mxu0 %v954
        %1276 = vmatprep.subr.bf16.mxu0 %v959
        %1277 = vmatpush1.bf16.msra.mxu0 %v958
        %1278 = vmatprep.subr.bf16.mxu0 %v963
        %1279 = vmatpush1.bf16.msra.mxu0 %v962
        %1280 = vmatprep.subr.bf16.mxu0 %v967
        %1281 = vmatpush1.bf16.msra.mxu0 %v966
        %1282 = vmatprep.subr.bf16.mxu0 %v971
        %1283 = vmatpush1.bf16.msra.mxu0 %v970
        %1284 = vmatprep.subr.bf16.mxu0 %v975
        %1285 = vmatpush1.bf16.msra.mxu0 %v974
        %1286 = vmatprep.subr.bf16.mxu0 %v979
        %1287 = vmatpush1.bf16.msra.mxu0 %v978
        %1288 = vmatprep.subr.bf16.mxu0 %v983
        %1289 = vmatpush1.bf16.msra.mxu0 %v982
        %1290 = vmatprep.mubr.bf16.mxu0 %v383
        %1291 = vmatmul.mubr.bf16.gmra.mrb[0].mxu0 %v382
        %v1292 = vpop.f32.mrb[0].mxu0
        %v1293 = vadd.f32 %v527, %v1292
        %v1294 = vpop.f32.mrb[0].mxu0
        %v1295 = vadd.f32 %v531, %v1294
        %v1296 = vpop.f32.mrb[0].mxu0
        %v1297 = vpop.f32.mrb[0].mxu0
        %1298 = vdwg.mxu0
        %1299 = vmatprep.subr.bf16.mxu0 %v987
        %1300 = vmatpush1.bf16.msra.mxu0 %v986
        %1301 = vmatprep.subr.bf16.mxu0 %v991
        %1302 = vmatpush1.bf16.msra.mxu0 %v990
        %1303 = vmatprep.subr.bf16.mxu0 %v995
        %1304 = vmatpush1.bf16.msra.mxu0 %v994
        %1305 = vmatprep.subr.bf16.mxu0 %v999
        %1306 = vmatpush1.bf16.msra.mxu0 %v998
        %1307 = vmatprep.subr.bf16.mxu0 %v1003
        %1308 = vmatpush1.bf16.msra.mxu0 %v1002
        %1309 = vmatprep.subr.bf16.mxu0 %v1007
        %1310 = vmatpush1.bf16.msra.mxu0 %v1006
        %1311 = vmatprep.subr.bf16.mxu0 %v1011
        %1312 = vmatpush1.bf16.msra.mxu0 %v1010
        %1313 = vmatprep.subr.bf16.mxu0 %v1015
        %1314 = vmatpush1.bf16.msra.mxu0 %v1014
        %1315 = vmatprep.subr.bf16.mxu0 %v1019
        %1316 = vmatpush1.bf16.msra.mxu0 %v1018
        %1317 = vmatprep.subr.bf16.mxu0 %v1023
        %1318 = vmatpush1.bf16.msra.mxu0 %v1022
        %1319 = vmatprep.subr.bf16.mxu0 %v1027
        %1320 = vmatpush1.bf16.msra.mxu0 %v1026
        %1321 = vmatprep.subr.bf16.mxu0 %v1031
        %1322 = vmatpush1.bf16.msra.mxu0 %v1030
        %1323 = vmatprep.subr.bf16.mxu0 %v1035
        %1324 = vmatpush1.bf16.msra.mxu0 %v1034
        %1325 = vmatprep.subr.bf16.mxu0 %v1039
        %1326 = vmatpush1.bf16.msra.mxu0 %v1038
        %1327 = vmatprep.subr.bf16.mxu0 %v1043
        %1328 = vmatpush1.bf16.msra.mxu0 %v1042
        %1329 = vmatprep.subr.bf16.mxu0 %v1047
        %1330 = vmatpush1.bf16.msra.mxu0 %v1046
        %1331 = vmatprep.mubr.bf16.mxu0 %v385
        %1332 = vmatmul.mubr.bf16.gmra.mrb[0].mxu0 %v384
        %v1333 = vpop.f32.mrb[0].mxu0
        %v1334 = vadd.f32 %v1293, %v1333
        %v1335 = vpop.f32.mrb[0].mxu0
        %v1336 = vadd.f32 %v1295, %v1335
        %v1337 = vpop.f32.mrb[0].mxu0
        %v1338 = vpop.f32.mrb[0].mxu0
        %1339 = vdwg.mxu0
        %v1340 = vxor.u32 %v1252, 2147483648
        %v1341 = vxor.u32 %v1254, 2147483648
        %v1342 = vxor.u32 %v1334, 2147483648
        %v1343 = vxor.u32 %v1336, 2147483648
        %v1344 = vmul.f32 %v1340, 1.442695
        %v1345 = vpow.pop %v1344
        %v1346 = vmul.f32 %v1341, 1.442695
        %v1347 = vpow.pop %v1346
        %v1348 = vmul.f32 %v1342, 1.442695
        %v1349 = vpow.pop %v1348
        %v1350 = vmul.f32 %v1343, 1.442695
        %v1351 = vpow.pop %v1350
        %v1352 = vadd.f32 %v1345, 1.0
        %v1353 = vadd.f32 %v1347, 1.0
        %v1354 = vadd.f32 %v1349, 1.0
        %v1355 = vadd.f32 %v1351, 1.0
        %v1356 = vrcp.pop %v1352
        %v1357 = vmul.f32 1.0, %v1356
        %v1358 = vrcp.pop %v1353
        %v1359 = vmul.f32 1.0, %v1358
        %v1360 = vrcp.pop %v1354
        %v1361 = vmul.f32 1.0, %v1360
        %v1362 = vrcp.pop %v1355
        %v1363 = vmul.f32 1.0, %v1362
        %1364 = vst [vmem:[%s215] sm:$0xff] %v1357
        %1365 = vst [vmem:[%s215 + $0x8] sm:$0xff] %v1359
        %1366 = vst [vmem:[%s215 + $0x10] sm:$0xff] %v1361
        %1367 = vst [vmem:[%s215 + $0x18] sm:$0xff] %v1363
        %s1368 = sand.u32 %s137, 1
        %s1369 = scalar_lea.sflag [#allocation3], %s1368
        %s1370 = sand.u32 %s137, 1
        %s1371 = smul.addr %s1370, 32
        %s1372 = scalar_lea.vmem [#allocation2], %s1371
        // Predicated region
        $region41: #{py_forward.1} parent=39 // pred_check
          %p1373 = pneg %p147
        $region42: #{py_forward.1} parent=39 // pred_check_branch
          %1375 = sbr.rel (%p1373) target = $region44
        $region43: #{py_forward.1} parent=39 // pred_region
          %s1377 = ssub.s32 512, 512
          %1378 = vsyncadd %s1369, %s1377
          %s1379 = smul.addr %s19, 4
          %s1380 = smul.addr %s1379, 128
          %s1381 = scalar_lea.hbm %s5, %s1380
          %s1383 = sshll.u32 %s1372, 4
          %s1384 = int_to_ptr.vmem [resolvable:$true] %s1383
          %1386 = dma.vmem_to_hbm [thread:$0]  %s1384, 512, %s1381, %s1369
        $region44: #{py_forward.1} parent=39 // pred_fallthru
          _
      $region40: #{py_forward.1} parent=5 // pred_fallthru
        _
      %p1387 = scmp.le.s32.totalorder 2, %s14
      // Predicated region
      $region45: #{py_forward.1} parent=5 // pred_check
        %p1388 = pneg %p1387
      $region46: #{py_forward.1} parent=5 // pred_check_branch
        %1390 = sbr.rel (%p1388) target = $region48
      $region47: #{py_forward.1} parent=5 // pred_region
        %s1391 = ssub.s32 %s14, 2
        // Predicated region
        $region49: #{py_forward.1} parent=47 // pred_check
          %p1392 = pneg %p153
        $region50: #{py_forward.1} parent=47 // pred_check_branch
          %1394 = sbr.rel (%p1392) target = $region52
        $region51: #{py_forward.1} parent=47 // pred_region
          %s1395 = sand.u32 %s138, 1
          %s1396 = scalar_lea.sflag [#allocation3], %s1395
          %s1397 = sand.u32 %s138, 1
          %s1398 = smul.addr %s1397, 32
          %s1399 = scalar_lea.vmem [#allocation2], %s1398
          %1400 = dma.done %s1396, 512
        $region52: #{py_forward.1} parent=47 // pred_fallthru
          _
      $region48: #{py_forward.1} parent=5 // pred_fallthru
        _
    $region6: #{py_forward.1} parent=1 // loop_footer
      %s18 = sadd.s32 1, %s14
    $region7: #{py_forward.1} parent=1 // loop_footer_branch
      %13 = sbr.rel target = $region3
    $region8: #{py_forward.1} parent=1 // loop_exit
      _
    %1401 = vsyncpa [#allocation3], 1
    %s1402 = scalar_lea.sflag [#allocation3], 1
    %1403 = vsyncpa %s1402, 1

</llo_original>
